<compile_context>
chip_gen: v6e
topology: v6e:2x2x1
jax: 0.10.0
libtpu: 0.0.40
codegen_flags: <defaults>
</compile_context>

<pallas_src>
import functools
import math

import jax
import jax.numpy as jnp
from jax.experimental import pallas as pl
from jax.experimental.pallas import tpu as pltpu


def _attloss_kernel(pred_ref, label_ref, out_ref, acc_ref, *,
                    batch, block_rows, tiles_per_split, needs_mask):
    """Process one (block_rows, C) tile.

    Accumulates y_label * log(softmax(y_pred/0.5) + 1e-9) into a fixed (8, C)
    f32 slab; the single cross-lane/sublane reduction and the scalar store
    happen only on the last step of the inner (arbitrary) axis.
    """
    split = pl.program_id(0)
    step = pl.program_id(1)

    @pl.when(step == 0)
    def _init():
        acc_ref[...] = jnp.zeros_like(acc_ref)

    x = pred_ref[...].astype(jnp.float32) * 2.0            # y_pred / 0.5
    m = jnp.max(x, axis=-1, keepdims=True)                  # row-wise stable softmax
    e = jnp.exp(x - m)
    s = jnp.sum(e, axis=-1, keepdims=True)
    p = e * pl.reciprocal(s, approx=False) + 1e-9
    logp = jnp.log(p)

    contrib = label_ref[...].astype(jnp.float32) * logp     # (block_rows, C)

    if needs_mask:
        # Mask rows at/after the true batch size (garbage from the ragged
        # boundary tile). jnp.where is a select, so NaN/Inf in the discarded
        # branch cannot leak into the accumulator.
        row0 = (split * tiles_per_split + step) * block_rows
        rows = jax.lax.broadcasted_iota(jnp.int32, contrib.shape, 0) + row0
        contrib = jnp.where(rows < batch, contrib, 0.0)

    # Fold the (block_rows, C) tile down to an (8, C) slab with pure VALU adds
    # (the leading-dim split matches the sublane tiling), then accumulate.
    C = contrib.shape[-1]
    acc_ref[...] += jnp.sum(contrib.reshape(block_rows // 8, 8, C), axis=0)

    @pl.when(step == pl.num_programs(1) - 1)
    def _finalize():
        total = -jnp.sum(acc_ref[...])
        out_ref[...] = jnp.zeros_like(out_ref) + total       # broadcast scalar store


def _round_up(x, m):
    return ((x + m - 1) // m) * m


def _device_kind():
    try:
        return (jax.devices()[0].device_kind or "").lower()
    except Exception:
        return ""


def att_loss(y_pred, y_label, *, max_block_rows=4096, n_split=None,
             vmem_budget_bytes=None, vmem_limit_bytes=None):
    """y_pred, y_label: [B, C] (f32 or bf16). Returns scalar f32 loss."""
    B, C = y_pred.shape
    assert y_label.shape == (B, C)

    kind = _device_kind()
    is_v7 = ("v7" in kind) or ("tpu7" in kind)

    # Two TensorCores per chip only on v7x; on v5e/v6e a leading split is a
    # serial grid loop (pure per-step overhead), so keep it to 1 there.
    # TODO(synk): verify "parallel" actually shards the leading axis across
    # both v7x TensorCores; switch to pltpu.CORE_PARALLEL if one core idles.
    if n_split is None:
        n_split = 2 if is_v7 else 1
    if vmem_limit_bytes is None:
        vmem_limit_bytes = (48 << 20) if is_v7 else (64 << 20)
    if vmem_budget_bytes is None:
        vmem_budget_bytes = (32 << 20) if is_v7 else (48 << 20)

    # VMEM per row of batch tile:
    #   2 double-buffered input streams (each with its own dtype)
    #   + ~4 f32 compiler-materialized intermediates (x, e, logp, contrib).
    ip = jnp.dtype(y_pred.dtype).itemsize
    il = jnp.dtype(y_label.dtype).itemsize
    bytes_per_row = 2 * C * ip + 2 * C * il + 4 * C * 4
    rows_budget = max(8, (vmem_budget_bytes // bytes_per_row) // 8 * 8)

    rows_per_split = math.ceil(B / n_split)
    block_rows = min(max_block_rows, rows_budget, _round_up(rows_per_split, 8))
    block_rows = max(8, (block_rows // 8) * 8)

    tiles_per_split = math.ceil(rows_per_split / block_rows)
    # Only emit the row mask when the tiling is ragged (ragged boundary tiles
    # read unspecified rows which must contribute exactly 0).
    needs_mask = (n_split * tiles_per_split * block_rows) != B

    grid = (n_split, tiles_per_split)

    def in_map(c, i):
        return (c * tiles_per_split + i, 0)

    kernel = functools.partial(
        _attloss_kernel,
        batch=B,
        block_rows=block_rows,
        tiles_per_split=tiles_per_split,
        needs_mask=needs_mask,
    )

    partials = pl.pallas_call(
        kernel,
        out_shape=jax.ShapeDtypeStruct((n_split, 1, 1), jnp.float32),
        grid_spec=pltpu.PrefetchScalarGridSpec(
            num_scalar_prefetch=0,
            grid=grid,
            in_specs=[
                pl.BlockSpec((block_rows, C), in_map),
                pl.BlockSpec((block_rows, C), in_map),
            ],
            # One resident accumulator slot per parallel split (no cross-core race).
            out_specs=pl.BlockSpec((1, 1, 1), lambda c, i: (c, 0, 0)),
            scratch_shapes=[pltpu.VMEM((8, C), jnp.float32)],
        ),
        compiler_params=pltpu.CompilerParams(
            dimension_semantics=("parallel", "arbitrary"),
            vmem_limit_bytes=vmem_limit_bytes,
        ),
    )(y_pred, y_label)

    return jnp.sum(partials)


def _att_loss_ref(y_pred, y_label):
    x = y_pred.astype(jnp.float32) / 0.5
    p = jax.nn.softmax(x, axis=1) + 1e-9
    return -jnp.sum(y_label.astype(jnp.float32) * jnp.log(p))


if __name__ == "__main__":
    key = jax.random.PRNGKey(0)

    # Case 1: nicely aligned shapes (no mask emitted).
    k1, k2, k3, k4 = jax.random.split(key, 4)
    B, C = 64, 128
    y_pred = jax.random.normal(k1, (B, C), dtype=jnp.float32)
    y_label = jax.nn.softmax(jax.random.normal(k2, (B, C), dtype=jnp.float32), axis=1)
    loss = att_loss(y_pred, y_label)
    jax.block_until_ready(loss)
    ref = _att_loss_ref(y_pred, y_label)
    assert jnp.allclose(loss, ref, rtol=1e-5, atol=1e-3), (loss, ref)

    # Case 2: awkward shapes (exercises ragged-tile in-kernel masking, no pad).
    B2, C2 = 37, 100
    y_pred2 = jax.random.normal(k3, (B2, C2), dtype=jnp.float32)
    y_label2 = jax.nn.softmax(jax.random.normal(k4, (B2, C2), dtype=jnp.float32), axis=1)
    loss2 = att_loss(y_pred2, y_label2)
    jax.block_until_ready(loss2)
    ref2 = _att_loss_ref(y_pred2, y_label2)
    assert jnp.allclose(loss2, ref2, rtol=1e-5, atol=1e-3), (loss2, ref2)

    print("KERNEL_OK")
</pallas_src>

<mosaic_0001>
module attributes {stable_mosaic.version = 11 : i64} {
  func.func @_attloss_kernel(%arg0: i32, %arg1: i32, %arg2: memref<64x128xf32, #tpu.memory_space<vmem>>, %arg3: memref<64x128xf32, #tpu.memory_space<vmem>>, %arg4: memref<1x1x1xf32, #tpu.memory_space<vmem>>, %arg5: memref<8x128xf32, #tpu.memory_space<vmem>>) attributes {dimension_semantics = [#tpu.dimension_semantics<parallel>, #tpu.dimension_semantics<arbitrary>], iteration_bounds = array<i64: 1, 1>, scalar_prefetch = 0 : i64, scratch_operands = 1 : i64, tpu.core_type = #tpu.core_type<tc>, window_params = [{transform_indices = @transform_0, window_bounds = array<i64: 64, 128>}, {transform_indices = @transform_1, window_bounds = array<i64: 64, 128>}, {transform_indices = @transform_2, window_bounds = array<i64: 1, 1, 1>}]} {
    %c0_i32 = arith.constant 0 : i32
    %0 = arith.cmpi eq, %arg1, %c0_i32 : i32
    %1 = arith.extui %0 : i1 to i32
    %c0_i32_0 = arith.constant 0 : i32
    %2 = arith.cmpi ne, %1, %c0_i32_0 : i32
    scf.if %2 {
      %cst_14 = arith.constant 0.000000e+00 : f32
      %29 = vector.broadcast %cst_14 : f32 to vector<8x128xf32>
      %c0_15 = arith.constant 0 : index
      %c0_16 = arith.constant 0 : index
      %30 = vector.load %arg5[%c0_15, %c0_16] : memref<8x128xf32, #tpu.memory_space<vmem>>, vector<8x128xf32>
      tpu.vector_store %arg5[%c0_15, %c0_16], %29 {strides = array<i32>} : memref<8x128xf32, #tpu.memory_space<vmem>>, vector<8x128xf32>,
    } else {
    }
    %c0 = arith.constant 0 : index
    %c0_1 = arith.constant 0 : index
    %3 = vector.load %arg2[%c0, %c0_1] : memref<64x128xf32, #tpu.memory_space<vmem>>, vector<64x128xf32>
    %cst = arith.constant 2.000000e+00 : f32
    %4 = vector.broadcast %cst : f32 to vector<64x128xf32>
    %5 = arith.mulf %3, %4 : vector<64x128xf32>
    %cst_2 = arith.constant dense<0xFF800000> : vector<64xf32>
    %6 = vector.multi_reduction <maximumf>, %5, %cst_2 [1] : vector<64x128xf32> to vector<64xf32>
    %7 = vector.shape_cast %6 : vector<64xf32> to vector<64x1xf32>
    %8 = vector.broadcast %7 : vector<64x1xf32> to vector<64x128xf32>
    %9 = arith.subf %5, %8 : vector<64x128xf32>
    %10 = math.exp %9 : vector<64x128xf32>
    %cst_3 = arith.constant dense<0.000000e+00> : vector<64xf32>
    %11 = vector.multi_reduction <add>, %10, %cst_3 [1] : vector<64x128xf32> to vector<64xf32>
    %12 = vector.shape_cast %11 : vector<64xf32> to vector<64x1xf32>
    %13 = tpu.reciprocal %12 : vector<64x1xf32> -> vector<64x1xf32>
    %14 = vector.broadcast %13 : vector<64x1xf32> to vector<64x128xf32>
    %15 = arith.mulf %10, %14 : vector<64x128xf32>
    %cst_4 = arith.constant 9.99999971E-10 : f32
    %16 = vector.broadcast %cst_4 : f32 to vector<64x128xf32>
    %17 = arith.addf %15, %16 : vector<64x128xf32>
    %18 = math.log %17 : vector<64x128xf32>
    %c0_5 = arith.constant 0 : index
    %c0_6 = arith.constant 0 : index
    %19 = vector.load %arg3[%c0_5, %c0_6] : memref<64x128xf32, #tpu.memory_space<vmem>>, vector<64x128xf32>
    %20 = arith.mulf %19, %18 : vector<64x128xf32>
    %c0_7 = arith.constant 0 : index
    %c0_8 = arith.constant 0 : index
    %21 = vector.load %arg5[%c0_7, %c0_8] : memref<8x128xf32, #tpu.memory_space<vmem>>, vector<8x128xf32>
    %22 = vector.shape_cast %20 : vector<64x128xf32> to vector<8x8x128xf32>
    %cst_9 = arith.constant dense<0.000000e+00> : vector<8x128xf32>
    %23 = vector.multi_reduction <add>, %22, %cst_9 [0] : vector<8x8x128xf32> to vector<8x128xf32>
    %24 = arith.addf %21, %23 : vector<8x128xf32>
    %c0_10 = arith.constant 0 : index
    %c0_11 = arith.constant 0 : index
    %25 = vector.load %arg5[%c0_10, %c0_11] : memref<8x128xf32, #tpu.memory_space<vmem>>, vector<8x128xf32>
    tpu.vector_store %arg5[%c0_10, %c0_11], %24 {strides = array<i32>} : memref<8x128xf32, #tpu.memory_space<vmem>>, vector<8x128xf32>,
    %c0_i32_12 = arith.constant 0 : i32
    %26 = arith.cmpi eq, %arg1, %c0_i32_12 : i32
    %27 = arith.extui %26 : i1 to i32
    %c0_i32_13 = arith.constant 0 : i32
    %28 = arith.cmpi ne, %27, %c0_i32_13 : i32
    scf.if %28 {
      %c0_14 = arith.constant 0 : index
      %c0_15 = arith.constant 0 : index
      %29 = vector.load %arg5[%c0_14, %c0_15] : memref<8x128xf32, #tpu.memory_space<vmem>>, vector<8x128xf32>
      %30 = vector.shape_cast %29 : vector<8x128xf32> to vector<1x8x128xf32>
      %cst_16 = arith.constant dense<0.000000e+00> : vector<1xf32>
      %31 = vector.multi_reduction <add>, %30, %cst_16 [1, 2] : vector<1x8x128xf32> to vector<1xf32>
      %32 = vector.shape_cast %31 : vector<1xf32> to vector<1x1x1xf32>
      %33 = vector.extract %32[0, 0, 0] : f32 from vector<1x1x1xf32>
      %cst_17 = arith.constant 0.000000e+00 : f32
      %34 = arith.subf %cst_17, %33 : f32
      %cst_18 = arith.constant 0.000000e+00 : f32
      %35 = vector.broadcast %cst_18 : f32 to vector<1x1x1xf32>
      %36 = vector.broadcast %34 : f32 to vector<1x1x1xf32>
      %37 = arith.addf %35, %36 : vector<1x1x1xf32>
      %c0_19 = arith.constant 0 : index
      %c0_20 = arith.constant 0 : index
      %c0_21 = arith.constant 0 : index
      %38 = vector.load %arg4[%c0_19, %c0_20, %c0_21] : memref<1x1x1xf32, #tpu.memory_space<vmem>>, vector<1x1x1xf32>
      tpu.vector_store %arg4[%c0_19, %c0_20, %c0_21], %37 {strides = array<i32>} : memref<1x1x1xf32, #tpu.memory_space<vmem>>, vector<1x1x1xf32>,
    } else {
    }
    return
  }
  func.func @transform_0(%arg0: i32, %arg1: i32) -> (i32, i32) {
    %c1_i32 = arith.constant 1 : i32
    %0 = arith.muli %arg0, %c1_i32 : i32
    %1 = arith.addi %0, %arg1 : i32
    %c0_i32 = arith.constant 0 : i32
    %c0_i32_0 = arith.constant 0 : i32
    return %1, %c0_i32 : i32, i32
  }
  func.func @transform_1(%arg0: i32, %arg1: i32) -> (i32, i32) {
    %c1_i32 = arith.constant 1 : i32
    %0 = arith.muli %arg0, %c1_i32 : i32
    %1 = arith.addi %0, %arg1 : i32
    %c0_i32 = arith.constant 0 : i32
    %c0_i32_0 = arith.constant 0 : i32
    return %1, %c0_i32 : i32, i32
  }
  func.func @transform_2(%arg0: i32, %arg1: i32) -> (i32, i32, i32) {
    %c0_i32 = arith.constant 0 : i32
    %c0_i32_0 = arith.constant 0 : i32
    %c0_i32_1 = arith.constant 0 : i32
    return %arg0, %c0_i32, %c0_i32_0 : i32, i32, i32
  }
}

</mosaic_0001>

<llo_original>
// kernel: tpu_custom_call.1
$region0: #{tpu_custom_call.1}
  #allocation0 [shape = 'u32[]', space=smem, size = 0x4, offset = 0x4, fixed_abs, tag = 'smem constant byte address 0x4 - core index']
  #allocation1 [shape = 'u32[144,128]{1,0:T(1,128)}', space=vmem, size = 0x12000, scoped, tag = 'internal scratch']
  #allocation2 [shape = 'f32[8,128]{1,0:T(8,128)}', space=vmem, size = 0x1000, scoped, tag = 'scratch operand']
  %s0 = inlined_call_operand.hbm [shape: f32[64,128], index: 0, kind: input, shape index: {}]
  %s1 = inlined_call_operand.hbm [shape: f32[64,128], index: 1, kind: input, shape index: {}]
  %s2 = inlined_call_operand.hbm [shape: f32[1,1,1], index: 2, kind: output, shape index: {}]
  %s3 = sld [smem:[#allocation0]]
  $region34: #{tpu_custom_call.1} parent=0
    _
  %s5 = ssub.s32 1, %s3
  %s6 = scalar_select 0, %s5, %s3
  $region1: #{tpu_custom_call.1} parent=0
    #allocation3 [shape = 'u8[32768]{0}', space=vmem, size = 0x8000, scoped, tag = 'input window, operand 0, single buffered']
    #allocation4 [shape = 's32[1]{0}', space=sflag, size = 0x4, scoped, tag = 'scoped memory for tpu_custom_call.1']
    #allocation5 [shape = 's32[1]{0}', space=sflag, size = 0x4, scoped, tag = 'scoped memory for tpu_custom_call.1']
    #allocation6 [shape = 'u8[32768]{0}', space=vmem, size = 0x8000, scoped, tag = 'input window, operand 1, single buffered']
    #allocation7 [shape = 's32[1]{0}', space=sflag, size = 0x4, scoped, tag = 'scoped memory for tpu_custom_call.1']
    #allocation8 [shape = 'u8[512]{0}', space=vmem, size = 0x400, scoped, tag = 'output window, operand 0, single buffered']
    %7 = vsyncpa [#allocation4], 0
    %8 = vsyncpa [#allocation7], 0
    %9 = vsyncpa [#allocation5], 0
    // Predicated region
    $region2: #{tpu_custom_call.1} parent=1 // pred_check
      _
    $region3: #{tpu_custom_call.1} parent=1 // pred_check_branch
      %11 = sbr.rel (0) target = $region5
    $region4: #{tpu_custom_call.1} parent=1 // pred_region
      %s12 = sadd.s32 0, 0
      %s13 = smul.u32 8, %s12
      %s15 = ssub.s32 1024, 1024
      %16 = vsyncadd [#allocation4], %s15
      %s17 = smul.addr %s13, 128
      %s18 = scalar_lea.hbm %s0, %s17
      %s19 = sshll.u32 [#allocation3], 4
      %s20 = int_to_ptr.vmem [resolvable:$true] %s19
      %25 = dma.hbm_to_vmem [thread:$0]  %s18, 1024, %s20, [#allocation4], 128, 128, 8
    $region5: #{tpu_custom_call.1} parent=1 // pred_fallthru
      _
    // Predicated region
    $region6: #{tpu_custom_call.1} parent=1 // pred_check
      _
    $region7: #{tpu_custom_call.1} parent=1 // pred_check_branch
      %27 = sbr.rel (0) target = $region9
    $region8: #{tpu_custom_call.1} parent=1 // pred_region
      %s28 = sadd.s32 0, 0
      %s29 = smul.u32 8, %s28
      %s31 = ssub.s32 1024, 1024
      %32 = vsyncadd [#allocation7], %s31
      %s33 = smul.addr %s29, 128
      %s34 = scalar_lea.hbm %s1, %s33
      %s35 = sshll.u32 [#allocation6], 4
      %s36 = int_to_ptr.vmem [resolvable:$true] %s35
      %41 = dma.hbm_to_vmem [thread:$0]  %s34, 1024, %s36, [#allocation7], 128, 128, 8
    $region9: #{tpu_custom_call.1} parent=1 // pred_fallthru
      _
    // Predicated region
    $region10: #{tpu_custom_call.1} parent=1 // pred_check
      _
    $region11: #{tpu_custom_call.1} parent=1 // pred_check_branch
      %43 = sbr.rel (0) target = $region13
    $region12: #{tpu_custom_call.1} parent=1 // pred_region
      %44 = dma.done [#allocation4], 1024
    $region13: #{tpu_custom_call.1} parent=1 // pred_fallthru
      _
    // Predicated region
    $region14: #{tpu_custom_call.1} parent=1 // pred_check
      _
    $region15: #{tpu_custom_call.1} parent=1 // pred_check_branch
      %46 = sbr.rel (0) target = $region17
    $region16: #{tpu_custom_call.1} parent=1 // pred_region
      %47 = dma.done [#allocation7], 1024
    $region17: #{tpu_custom_call.1} parent=1 // pred_fallthru
      _
    %s48 = sadd.s32 0, 0
    %s49 = smul.u32 8, %s48
    %s50 = sadd.s32 0, 0
    %s51 = smul.u32 8, %s50
    %p52 = scmp.eq.s32.totalorder 0, 0
    // Predicated region
    $region18: #{tpu_custom_call.1} parent=1 // pred_check
      %p53 = pneg %p52
    $region19: #{tpu_custom_call.1} parent=1 // pred_check_branch
      %55 = sbr.rel (%p53) target = $region21
    $region20: #{tpu_custom_call.1} parent=1 // pred_region
      %56 = vst [vmem:[#allocation2] sm:$0xff] 0.0
    $region21: #{tpu_custom_call.1} parent=1 // pred_fallthru
      _
    %v57 = vld [vmem:[#allocation3] sm:$0xff]
    %v58 = vld [vmem:[#allocation3 + $0x8] sm:$0xff]
    %v59 = vld [vmem:[#allocation3 + $0x10] sm:$0xff]
    %v60 = vld [vmem:[#allocation3 + $0x18] sm:$0xff]
    %v61 = vld [vmem:[#allocation3 + $0x20] sm:$0xff]
    %v62 = vld [vmem:[#allocation3 + $0x28] sm:$0xff]
    %v63 = vld [vmem:[#allocation3 + $0x30] sm:$0xff]
    %v64 = vld [vmem:[#allocation3 + $0x38] sm:$0xff]
    %v65 = vmul.f32 %v57, 2.0
    %v66 = vmul.f32 %v58, 2.0
    %v67 = vmul.f32 %v59, 2.0
    %v68 = vmul.f32 %v60, 2.0
    %v69 = vmul.f32 %v61, 2.0
    %v70 = vmul.f32 %v62, 2.0
    %v71 = vmul.f32 %v63, 2.0
    %v72 = vmul.f32 %v64, 2.0
    %73 = vmax.xlane.f32.xlu0 %v65
    %v74 = vpop.xlane.xlu0 %73
    %75 = vmax.xlane.f32.xlu0 %v66
    %v76 = vpop.xlane.xlu0 %75
    %77 = vmax.xlane.f32.xlu0 %v67
    %v78 = vpop.xlane.xlu0 %77
    %79 = vmax.xlane.f32.xlu0 %v68
    %v80 = vpop.xlane.xlu0 %79
    %81 = vmax.xlane.f32.xlu0 %v69
    %v82 = vpop.xlane.xlu0 %81
    %83 = vmax.xlane.f32.xlu0 %v70
    %v84 = vpop.xlane.xlu0 %83
    %85 = vmax.xlane.f32.xlu0 %v71
    %v86 = vpop.xlane.xlu0 %85
    %87 = vmax.xlane.f32.xlu0 %v72
    %v88 = vpop.xlane.xlu0 %87
    %v89 = vsub.f32 %v65, %v74
    %v90 = vsub.f32 %v66, %v76
    %v91 = vsub.f32 %v67, %v78
    %v92 = vsub.f32 %v68, %v80
    %v93 = vsub.f32 %v69, %v82
    %v94 = vsub.f32 %v70, %v84
    %v95 = vsub.f32 %v71, %v86
    %v96 = vsub.f32 %v72, %v88
    %v97 = vmul.f32 %v89, 1.442695
    %v98 = vpow.pop %v97
    %v99 = vmul.f32 %v90, 1.442695
    %v100 = vpow.pop %v99
    %v101 = vmul.f32 %v91, 1.442695
    %v102 = vpow.pop %v101
    %v103 = vmul.f32 %v92, 1.442695
    %v104 = vpow.pop %v103
    %v105 = vmul.f32 %v93, 1.442695
    %v106 = vpow.pop %v105
    %v107 = vmul.f32 %v94, 1.442695
    %v108 = vpow.pop %v107
    %v109 = vmul.f32 %v95, 1.442695
    %v110 = vpow.pop %v109
    %v111 = vmul.f32 %v96, 1.442695
    %v112 = vpow.pop %v111
    %113 = vadd.xlane.f32.xlu0 %v98
    %v114 = vpop.xlane.xlu0 %113
    %115 = vadd.xlane.f32.xlu0 %v100
    %v116 = vpop.xlane.xlu0 %115
    %117 = vadd.xlane.f32.xlu0 %v102
    %v118 = vpop.xlane.xlu0 %117
    %119 = vadd.xlane.f32.xlu0 %v104
    %v120 = vpop.xlane.xlu0 %119
    %121 = vadd.xlane.f32.xlu0 %v106
    %v122 = vpop.xlane.xlu0 %121
    %123 = vadd.xlane.f32.xlu0 %v108
    %v124 = vpop.xlane.xlu0 %123
    %125 = vadd.xlane.f32.xlu0 %v110
    %v126 = vpop.xlane.xlu0 %125
    %127 = vadd.xlane.f32.xlu0 %v112
    %v128 = vpop.xlane.xlu0 %127
    %v129 = vrcp.pop %v114
    %v130 = vrcp.pop %v116
    %v131 = vrcp.pop %v118
    %v132 = vrcp.pop %v120
    %v133 = vrcp.pop %v122
    %v134 = vrcp.pop %v124
    %v135 = vrcp.pop %v126
    %v136 = vrcp.pop %v128
    %v137 = vmul.f32 %v98, %v129
    %v138 = vmul.f32 %v100, %v130
    %v139 = vmul.f32 %v102, %v131
    %v140 = vmul.f32 %v104, %v132
    %v141 = vmul.f32 %v106, %v133
    %v142 = vmul.f32 %v108, %v134
    %v143 = vmul.f32 %v110, %v135
    %v144 = vmul.f32 %v112, %v136
    %v145 = vadd.f32 %v137, 1e-09
    %v146 = vadd.f32 %v138, 1e-09
    %v147 = vadd.f32 %v139, 1e-09
    %v148 = vadd.f32 %v140, 1e-09
    %v149 = vadd.f32 %v141, 1e-09
    %v150 = vadd.f32 %v142, 1e-09
    %v151 = vadd.f32 %v143, 1e-09
    %v152 = vadd.f32 %v144, 1e-09
    %v153 = vlog2.pop %v145
    %v154 = vmul.f32 %v153, 0.6931472
    %v155 = vlog2.pop %v146
    %v156 = vmul.f32 %v155, 0.6931472
    %v157 = vlog2.pop %v147
    %v158 = vmul.f32 %v157, 0.6931472
    %v159 = vlog2.pop %v148
    %v160 = vmul.f32 %v159, 0.6931472
    %v161 = vlog2.pop %v149
    %v162 = vmul.f32 %v161, 0.6931472
    %v163 = vlog2.pop %v150
    %v164 = vmul.f32 %v163, 0.6931472
    %v165 = vlog2.pop %v151
    %v166 = vmul.f32 %v165, 0.6931472
    %v167 = vlog2.pop %v152
    %v168 = vmul.f32 %v167, 0.6931472
    %v169 = vld [vmem:[#allocation6] sm:$0xff]
    %v170 = vld [vmem:[#allocation6 + $0x8] sm:$0xff]
    %v171 = vld [vmem:[#allocation6 + $0x10] sm:$0xff]
    %v172 = vld [vmem:[#allocation6 + $0x18] sm:$0xff]
    %v173 = vld [vmem:[#allocation6 + $0x20] sm:$0xff]
    %v174 = vld [vmem:[#allocation6 + $0x28] sm:$0xff]
    %v175 = vld [vmem:[#allocation6 + $0x30] sm:$0xff]
    %v176 = vld [vmem:[#allocation6 + $0x38] sm:$0xff]
    %v177 = vmul.f32 %v169, %v154
    %v178 = vmul.f32 %v170, %v156
    %v179 = vmul.f32 %v171, %v158
    %v180 = vmul.f32 %v172, %v160
    %v181 = vmul.f32 %v173, %v162
    %v182 = vmul.f32 %v174, %v164
    %v183 = vmul.f32 %v175, %v166
    %v184 = vmul.f32 %v176, %v168
    %v185 = vld [vmem:[#allocation2] sm:$0xff]
    %v186 = vadd.f32 %v177, %v178
    %v187 = vadd.f32 %v186, %v179
    %v188 = vadd.f32 %v187, %v180
    %v189 = vadd.f32 %v188, %v181
    %v190 = vadd.f32 %v189, %v182
    %v191 = vadd.f32 %v190, %v183
    %v192 = vadd.f32 %v191, %v184
    %v193 = vadd.f32 %v185, %v192
    %194 = vst [vmem:[#allocation2] sm:$0xff] %v193
    // Predicated region
    $region22: #{tpu_custom_call.1} parent=1 // pred_check
      %p195 = pneg %p52
    $region23: #{tpu_custom_call.1} parent=1 // pred_check_branch
      %197 = sbr.rel (%p195) target = $region25
    $region24: #{tpu_custom_call.1} parent=1 // pred_region
      %v198 = vld [vmem:[#allocation2] sm:$0xff]
      %199 = vadd.xlane.f32.xlu0 %v198
      %v200 = vpop.xlane.xlu0 %199
      %v201 = vrot.slane %v200, 4
      %v202 = vadd.f32 %v200, %v201
      %v203 = vrot.slane %v202, 2
      %v204 = vadd.f32 %v202, %v203
      %v205 = vrot.slane %v204, 1
      %v206 = vadd.f32 %v204, %v205
      %s207 = vtos %v206
      %s208 = ssub.f32 0.0, %s207
      %v209 = vstv %s208
      %v210 = vadd.f32 %v209, 0.0
      %vm211 = vcmask 0
      %212 = vst.msk [vmem:[#allocation8] sm:$0x1] %vm211, %v210
    $region25: #{tpu_custom_call.1} parent=1 // pred_fallthru
      _
    // Predicated region
    $region26: #{tpu_custom_call.1} parent=1 // pred_check
      _
    $region27: #{tpu_custom_call.1} parent=1 // pred_check_branch
      %214 = sbr.rel (0) target = $region29
    $region28: #{tpu_custom_call.1} parent=1 // pred_region
      %s216 = ssub.s32 16, 16
      %217 = vsyncadd [#allocation5], %s216
      %s219 = sshll.u32 [#allocation8], 4
      %s220 = int_to_ptr.vmem [resolvable:$true] %s219
      %222 = dma.vmem_to_hbm [thread:$0]  %s220, 16, %s2, [#allocation5]
    $region29: #{tpu_custom_call.1} parent=1 // pred_fallthru
      _
    // Predicated region
    $region30: #{tpu_custom_call.1} parent=1 // pred_check
      _
    $region31: #{tpu_custom_call.1} parent=1 // pred_check_branch
      %224 = sbr.rel (0) target = $region33
    $region32: #{tpu_custom_call.1} parent=1 // pred_region
      %225 = dma.done [#allocation5], 16
    $region33: #{tpu_custom_call.1} parent=1 // pred_fallthru
      _
    %226 = vsyncpa [#allocation4], 1
    %227 = vsyncpa [#allocation7], 1
    %228 = vsyncpa [#allocation5], 1

</llo_original>
